<compile_context>
chip_gen: v7x
topology: tpu7x:2x2x1
jax: 0.10.0
libtpu: 0.0.40
codegen_flags: <defaults>
</compile_context>

<pallas_src>
import jax
import jax.numpy as jnp
from jax.experimental import pallas as pl
from jax.experimental.pallas import tpu as pltpu


_VMEM_LIMIT = 32 * 1024 * 1024  # explicit scoped-VMEM budget; safe on v5e/v6e/v7x


def _pick_tile(dim, target):
    """Largest 128-multiple divisor of `dim` that is <= target (else full dim)."""
    if dim <= target:
        return dim
    t = (target // 128) * 128
    while t >= 128:
        if dim % t == 0:
            return t
        t -= 128
    return dim


# ----------------------------------------------------------------------------
# Kernel 1: tiled accumulator matmul  C[M,N] = A[M,K] @ B[K,N]
#   grid = (M//tm, K//tk); N (= hidden_dim, small) is kept whole.
# ----------------------------------------------------------------------------
def _matmul_acc_kernel(a_ref, b_ref, o_ref, acc_ref):
    @pl.when(pl.program_id(1) == 0)
    def _init():
        acc_ref[...] = jnp.zeros_like(acc_ref)

    acc_ref[...] += jnp.dot(a_ref[...], b_ref[...],
                            preferred_element_type=jnp.float32)

    @pl.when(pl.program_id(1) == pl.num_programs(1) - 1)
    def _done():
        o_ref[...] = acc_ref[...].astype(o_ref.dtype)


def tiled_matmul(a, b, *, tm=512, tk=512, out_dtype=jnp.float32):
    M, K = a.shape
    K2, N = b.shape
    assert K == K2
    tm = _pick_tile(M, tm)
    tk = _pick_tile(K, tk)
    grid = (M // tm, K // tk)
    flops = 2 * M * K * N
    bytes_accessed = (M * K * a.dtype.itemsize
                      + (M // tm) * K * N * b.dtype.itemsize
                      + M * N * jnp.dtype(out_dtype).itemsize)
    return pl.pallas_call(
        _matmul_acc_kernel,
        out_shape=jax.ShapeDtypeStruct((M, N), out_dtype),
        grid_spec=pltpu.PrefetchScalarGridSpec(
            num_scalar_prefetch=0,
            grid=grid,
            in_specs=[
                pl.BlockSpec((tm, tk), lambda i, k: (i, k)),
                pl.BlockSpec((tk, N), lambda i, k: (k, 0)),
            ],
            out_specs=pl.BlockSpec((tm, N), lambda i, k: (i, 0)),
            scratch_shapes=[pltpu.VMEM((tm, N), jnp.float32)],
        ),
        compiler_params=pltpu.CompilerParams(
            dimension_semantics=("parallel", "arbitrary"),
            vmem_limit_bytes=_VMEM_LIMIT,
        ),
        cost_estimate=pl.CostEstimate(flops=int(flops), transcendentals=0,
                                      bytes_accessed=int(bytes_accessed)),
    )(a, b)


# ----------------------------------------------------------------------------
# Kernel 2: row-block matmul  C[B,N] = A[B,K] @ W[K,N], tiled along N.
#   A (a small batch of rows) stays resident; W / C stream in lane-dense tiles.
#   Used for score = user_batch @ items^T and the confidence output layer.
# ----------------------------------------------------------------------------
def _rowblock_matmul_kernel(a_ref, b_ref, o_ref):
    o_ref[...] = jnp.dot(a_ref[...], b_ref[...],
                         preferred_element_type=jnp.float32).astype(o_ref.dtype)


def rowblock_matmul(a, b, *, tn=512, out_dtype=jnp.float32):
    M, K = a.shape
    K2, N = b.shape
    assert K == K2
    tn = _pick_tile(N, tn)
    grid = (N // tn,)
    flops = 2 * M * K * N
    bytes_accessed = ((N // tn) * M * K * a.dtype.itemsize
                      + K * N * b.dtype.itemsize
                      + M * N * jnp.dtype(out_dtype).itemsize)
    return pl.pallas_call(
        _rowblock_matmul_kernel,
        out_shape=jax.ShapeDtypeStruct((M, N), out_dtype),
        grid_spec=pltpu.PrefetchScalarGridSpec(
            num_scalar_prefetch=0,
            grid=grid,
            in_specs=[
                pl.BlockSpec((M, K), lambda j: (0, 0)),
                pl.BlockSpec((K, tn), lambda j: (0, j)),
            ],
            out_specs=pl.BlockSpec((M, tn), lambda j: (0, j)),
        ),
        compiler_params=pltpu.CompilerParams(
            dimension_semantics=("parallel",),
            vmem_limit_bytes=_VMEM_LIMIT,
        ),
        cost_estimate=pl.CostEstimate(flops=int(flops), transcendentals=0,
                                      bytes_accessed=int(bytes_accessed)),
    )(a, b)


# ----------------------------------------------------------------------------
# Kernel 3: confidence hidden layer
#   h = (x / max(||x||_2, 1e-12)) @ W1^T  [+ user_uncertain_emb[idx]]
#   Row scaling commutes with the matmul, so the per-row sum-of-squares is
#   accumulated alongside the K-tiled matmul and applied at the last K step.
# ----------------------------------------------------------------------------
def _make_conf_hidden_kernel(has_uu):
    def kernel(*refs):
        if has_uu:
            x_ref, w1t_ref, uu_ref, h_ref, acc_ref, ss_ref = refs
        else:
            x_ref, w1t_ref, h_ref, acc_ref, ss_ref = refs
            uu_ref = None

        @pl.when(pl.program_id(0) == 0)
        def _init():
            acc_ref[...] = jnp.zeros_like(acc_ref)
            ss_ref[...] = jnp.zeros_like(ss_ref)

        x = x_ref[...]
        acc_ref[...] += jnp.dot(x, w1t_ref[...],
                                preferred_element_type=jnp.float32)
        ss_ref[...] += jnp.sum(x * x, axis=1, keepdims=True)

        @pl.when(pl.program_id(0) == pl.num_programs(0) - 1)
        def _done():
            # F.normalize semantics: x / max(||x||_2, 1e-12).
            nrm = jnp.sqrt(ss_ref[...])
            inv = pl.reciprocal(jnp.maximum(nrm, 1e-12), approx=False)
            h = acc_ref[...] * inv
            if has_uu:
                h = h + uu_ref[...]
            h_ref[...] = h.astype(h_ref.dtype)

    return kernel


def confidence_hidden(x, w1_t, uu=None, *, tk=512):
    B, NI = x.shape
    NI2, DIM = w1_t.shape
    assert NI == NI2
    tk = _pick_tile(NI, tk)
    grid = (NI // tk,)
    has_uu = uu is not None

    in_specs = [
        pl.BlockSpec((B, tk), lambda k: (0, k)),
        pl.BlockSpec((tk, DIM), lambda k: (k, 0)),
    ]
    args = [x, w1_t]
    if has_uu:
        in_specs.append(pl.BlockSpec((B, DIM), lambda k: (0, 0)))
        args.append(uu)

    return pl.pallas_call(
        _make_conf_hidden_kernel(has_uu),
        out_shape=jax.ShapeDtypeStruct((B, DIM), jnp.float32),
        grid_spec=pltpu.PrefetchScalarGridSpec(
            num_scalar_prefetch=0,
            grid=grid,
            in_specs=in_specs,
            out_specs=pl.BlockSpec((B, DIM), lambda k: (0, 0)),
            scratch_shapes=[pltpu.VMEM((B, DIM), jnp.float32),
                            pltpu.VMEM((B, 1), jnp.float32)],
        ),
        compiler_params=pltpu.CompilerParams(
            dimension_semantics=("arbitrary",),
            vmem_limit_bytes=_VMEM_LIMIT,
        ),
    )(*args)


# ----------------------------------------------------------------------------
# LightGCN propagation + layer averaging on the bipartite blocks:
#   users_{l+1} = Rn @ items_l,  items_{l+1} = Rn^T @ users_l
#   users_out = mean_l users_l,  items_out = mean_l items_l
# ----------------------------------------------------------------------------
def lgcn_propagate(rn_bf16, rnt_bf16, user_emb, item_emb, n_layers):
    u, it = user_emb, item_emb        # f32 accumulation state
    acc_u, acc_i = u, it
    for _ in range(n_layers):
        u_new = tiled_matmul(rn_bf16, it.astype(jnp.bfloat16))   # [NU, D]
        i_new = tiled_matmul(rnt_bf16, u.astype(jnp.bfloat16))   # [NI, D]
        u, it = u_new, i_new
        acc_u = acc_u + u
        acc_i = acc_i + it
    scale = 1.0 / float(n_layers + 1)
    return acc_u * scale, acc_i * scale


# ----------------------------------------------------------------------------
# Module wrapper (parameter setup + glue in plain JAX)
# ----------------------------------------------------------------------------
class LGCNLinearPallas:
    def __init__(self, user_item_net, n_layers=3, hidden_dim=128, num_user=128,
                 num_item=128, dim=256, user_uncertain=False, stage='backbone',
                 key=None):
        self.num_user = num_user
        self.num_item = num_item
        self.hidden_dim = hidden_dim
        self.n_layers = n_layers
        self.stage = stage
        self.user_uncertain = user_uncertain

        ks = jax.random.split(key, 5)
        # nn.init.normal_(std=0.01) analogues (deterministic, synthetic).
        self.user_embedding = 0.01 * jax.random.normal(ks[0], (num_user, hidden_dim), jnp.float32)
        self.item_embedding = 0.01 * jax.random.normal(ks[1], (num_item, hidden_dim), jnp.float32)
        self.user_uncertain_embedding = 0.01 * jax.random.normal(ks[2], (num_user, dim), jnp.float32)
        # c_layer weights: Linear(num_item->dim), Linear(dim->num_item), bias-free.
        # Stored pre-transposed so the kernels run plain [M,K]@[K,N] matmuls.
        w1 = 0.01 * jax.random.normal(ks[3], (dim, num_item), jnp.float32)
        w2 = 0.01 * jax.random.normal(ks[4], (num_item, dim), jnp.float32)
        self.w1_t = jnp.asarray(w1.T)   # [num_item, dim]
        self.w2_t = jnp.asarray(w2.T)   # [dim, num_item]

        # get_adj() equivalent: only the symmetric-normalized user-item block
        # Rn = Du^-1/2 R Di^-1/2 (and its transpose) is kept -- the zero
        # diagonal blocks of the dense (N x N) adjacency are never formed.
        R = user_item_net.astype(jnp.float32)
        deg_u = jnp.sum(R, axis=1)
        deg_i = jnp.sum(R, axis=0)
        du = jnp.where(deg_u > 0, deg_u ** -0.5, 0.0)
        di = jnp.where(deg_i > 0, deg_i ** -0.5, 0.0)
        rn = du[:, None] * R * di[None, :]
        self.Rn_f32 = rn                       # f32 copy (reference checks)
        self.Rn = rn.astype(jnp.bfloat16)      # bf16 MXU inputs
        self.RnT = rn.T.astype(jnp.bfloat16)
        self.has_adj = True

    def get_confidence(self, x, uu=None):
        h = confidence_hidden(x, self.w1_t, uu)        # [B, dim]
        return rowblock_matmul(h, self.w2_t)           # [B, num_item]

    def forward(self, x, input_idx):
        if self.has_adj:
            users, items = lgcn_propagate(self.Rn, self.RnT,
                                          self.user_embedding,
                                          self.item_embedding,
                                          self.n_layers)
        else:
            scale = 1.0 / float(self.n_layers + 1)
            users = self.user_embedding * scale
            items = self.item_embedding * scale

        # TODO(synk): fuse this gather into the score kernel via
        # PrefetchScalarGridSpec scalar-prefetch of input_idx.
        user_batch = jnp.take(users, input_idx, axis=0)          # [B, D]
        items_t = items.T                                        # [D, NI], hoisted transpose
        output = rowblock_matmul(user_batch.astype(jnp.bfloat16),
                                 items_t.astype(jnp.bfloat16))   # [B, NI]

        if self.stage == 'backbone':
            c = jnp.zeros_like(output)
        elif self.stage == 'uncertain':
            if self.user_uncertain:
                uu = jnp.take(self.user_uncertain_embedding, input_idx, axis=0)
                c = self.get_confidence(x, uu)
            else:
                c = self.get_confidence(x, None)
        else:
            raise ValueError(self.stage)
        return output, c


# ----------------------------------------------------------------------------
# Pure-JAX references (sanity checks)
# ----------------------------------------------------------------------------
def _reference_forward(model, input_idx):
    rn = model.Rn_f32
    u, it = model.user_embedding, model.item_embedding
    acc_u, acc_i = u, it
    for _ in range(model.n_layers):
        u, it = rn @ it, rn.T @ u
        acc_u = acc_u + u
        acc_i = acc_i + it
    scale = 1.0 / float(model.n_layers + 1)
    users, items = acc_u * scale, acc_i * scale
    return users[input_idx] @ items.T


def _reference_confidence(model, x, uu):
    nrm = jnp.sqrt(jnp.sum(x * x, axis=1, keepdims=True))
    c = x / jnp.maximum(nrm, 1e-12)
    c = c @ model.w1_t
    if uu is not None:
        c = c + uu
    return c @ model.w2_t


if __name__ == "__main__":
    key = jax.random.PRNGKey(0)
    k_net, k_model, k_x, k_idx = jax.random.split(key, 4)

    num_user, num_item, hidden_dim, dim, n_layers, batch = 128, 256, 128, 256, 3, 8

    user_item_net = (jax.random.uniform(k_net, (num_user, num_item)) < 0.05).astype(jnp.float32)
    x = jax.random.normal(k_x, (batch, num_item), jnp.float32)        # 'input'
    input_idx = jax.random.randint(k_idx, (batch,), 0, num_user)

    # --- backbone stage (module default) ---
    model = LGCNLinearPallas(user_item_net, n_layers=n_layers, hidden_dim=hidden_dim,
                             num_user=num_user, num_item=num_item, dim=dim,
                             user_uncertain=False, stage='backbone', key=k_model)
    output, c = model.forward(x, input_idx)
    jax.block_until_ready((output, c))
    assert output.shape == (batch, num_item) and c.shape == (batch, num_item)
    ref_out = _reference_forward(model, input_idx)
    # bf16 MXU inputs with f32 accumulation -> loosened tolerance vs. f32 reference.
    assert jnp.allclose(output, ref_out, rtol=2e-2, atol=1e-3), \
        float(jnp.max(jnp.abs(output - ref_out)))
    assert jnp.all(c == 0.0)

    # --- uncertain stage with user-uncertain embedding ---
    model_u = LGCNLinearPallas(user_item_net, n_layers=n_layers, hidden_dim=hidden_dim,
                               num_user=num_user, num_item=num_item, dim=dim,
                               user_uncertain=True, stage='uncertain', key=k_model)
    out_u, c_u = model_u.forward(x, input_idx)
    jax.block_until_ready((out_u, c_u))
    uu_ref = model_u.user_uncertain_embedding[input_idx]
    ref_c_u = _reference_confidence(model_u, x, uu_ref)
    assert c_u.shape == (batch, num_item)
    assert jnp.allclose(c_u, ref_c_u, rtol=1e-2, atol=1e-4), \
        float(jnp.max(jnp.abs(c_u - ref_c_u)))

    # --- uncertain stage without user-uncertain embedding (no dead uu input) ---
    model_nu = LGCNLinearPallas(user_item_net, n_layers=n_layers, hidden_dim=hidden_dim,
                                num_user=num_user, num_item=num_item, dim=dim,
                                user_uncertain=False, stage='uncertain', key=k_model)
    out_nu, c_nu = model_nu.forward(x, input_idx)
    jax.block_until_ready((out_nu, c_nu))
    ref_c_nu = _reference_confidence(model_nu, x, None)
    assert jnp.allclose(c_nu, ref_c_nu, rtol=1e-2, atol=1e-4), \
        float(jnp.max(jnp.abs(c_nu - ref_c_nu)))

    print("KERNEL_OK")
</pallas_src>

<mosaic_0001>
module attributes {stable_mosaic.version = 11 : i64} {
  func.func @_matmul_acc_kernel(%arg0: i32, %arg1: i32, %arg2: memref<128x256xbf16, #tpu.memory_space<vmem>>, %arg3: memref<256x128xbf16, #tpu.memory_space<vmem>>, %arg4: memref<128x128xf32, #tpu.memory_space<vmem>>, %arg5: memref<128x128xf32, #tpu.memory_space<vmem>>) attributes {dimension_semantics = [#tpu.dimension_semantics<parallel>, #tpu.dimension_semantics<arbitrary>], iteration_bounds = array<i64: 1, 1>, scalar_prefetch = 0 : i64, scratch_operands = 1 : i64, tpu.core_type = #tpu.core_type<tc>, window_params = [{transform_indices = @transform_0, window_bounds = array<i64: 128, 256>}, {transform_indices = @transform_1, window_bounds = array<i64: 256, 128>}, {transform_indices = @transform_2, window_bounds = array<i64: 128, 128>}]} {
    %c0_i32 = arith.constant 0 : i32
    %0 = arith.cmpi eq, %arg1, %c0_i32 : i32
    %1 = arith.extui %0 : i1 to i32
    %c0_i32_0 = arith.constant 0 : i32
    %2 = arith.cmpi ne, %1, %c0_i32_0 : i32
    scf.if %2 {
      %cst_10 = arith.constant 0.000000e+00 : f32
      %12 = vector.broadcast %cst_10 : f32 to vector<128x128xf32>
      %c0_11 = arith.constant 0 : index
      %c0_12 = arith.constant 0 : index
      %13 = vector.load %arg5[%c0_11, %c0_12] : memref<128x128xf32, #tpu.memory_space<vmem>>, vector<128x128xf32>
      tpu.vector_store %arg5[%c0_11, %c0_12], %12 {strides = array<i32>} : memref<128x128xf32, #tpu.memory_space<vmem>>, vector<128x128xf32>,
    } else {
    }
    %c0 = arith.constant 0 : index
    %c0_1 = arith.constant 0 : index
    %3 = vector.load %arg5[%c0, %c0_1] : memref<128x128xf32, #tpu.memory_space<vmem>>, vector<128x128xf32>
    %c0_2 = arith.constant 0 : index
    %c0_3 = arith.constant 0 : index
    %4 = vector.load %arg2[%c0_2, %c0_3] : memref<128x256xbf16, #tpu.memory_space<vmem>>, vector<128x256xbf16>
    %c0_4 = arith.constant 0 : index
    %c0_5 = arith.constant 0 : index
    %5 = vector.load %arg3[%c0_4, %c0_5] : memref<256x128xbf16, #tpu.memory_space<vmem>>, vector<256x128xbf16>
    %cst = arith.constant dense<0.000000e+00> : vector<128x128xf32>
    %6 = tpu.matmul %4, %5, %cst {dimension_numbers = #tpu.dot_dimension_numbers<[1], [0], [0], [1], [0, 0, 1, 1], [], []>} : vector<128x256xbf16>, vector<256x128xbf16>, vector<128x128xf32> -> vector<128x128xf32>
    %7 = arith.addf %3, %6 : vector<128x128xf32>
    %c0_6 = arith.constant 0 : index
    %c0_7 = arith.constant 0 : index
    %8 = vector.load %arg5[%c0_6, %c0_7] : memref<128x128xf32, #tpu.memory_space<vmem>>, vector<128x128xf32>
    tpu.vector_store %arg5[%c0_6, %c0_7], %7 {strides = array<i32>} : memref<128x128xf32, #tpu.memory_space<vmem>>, vector<128x128xf32>,
    %c0_i32_8 = arith.constant 0 : i32
    %9 = arith.cmpi eq, %arg1, %c0_i32_8 : i32
    %10 = arith.extui %9 : i1 to i32
    %c0_i32_9 = arith.constant 0 : i32
    %11 = arith.cmpi ne, %10, %c0_i32_9 : i32
    scf.if %11 {
      %c0_10 = arith.constant 0 : index
      %c0_11 = arith.constant 0 : index
      %12 = vector.load %arg5[%c0_10, %c0_11] : memref<128x128xf32, #tpu.memory_space<vmem>>, vector<128x128xf32>
      %c0_12 = arith.constant 0 : index
      %c0_13 = arith.constant 0 : index
      %13 = vector.load %arg4[%c0_12, %c0_13] : memref<128x128xf32, #tpu.memory_space<vmem>>, vector<128x128xf32>
      tpu.vector_store %arg4[%c0_12, %c0_13], %12 {strides = array<i32>} : memref<128x128xf32, #tpu.memory_space<vmem>>, vector<128x128xf32>,
    } else {
    }
    return
  }
  func.func @transform_0(%arg0: i32, %arg1: i32) -> (i32, i32) {
    %c0_i32 = arith.constant 0 : i32
    return %arg0, %arg1 : i32, i32
  }
  func.func @transform_1(%arg0: i32, %arg1: i32) -> (i32, i32) {
    %c0_i32 = arith.constant 0 : i32
    %c0_i32_0 = arith.constant 0 : i32
    return %arg1, %c0_i32 : i32, i32
  }
  func.func @transform_2(%arg0: i32, %arg1: i32) -> (i32, i32) {
    %c0_i32 = arith.constant 0 : i32
    %c0_i32_0 = arith.constant 0 : i32
    return %arg0, %c0_i32 : i32, i32
  }
}

</mosaic_0001>

<llo_original>
// kernel: tpu_custom_call.1
$region0: #{tpu_custom_call.1}
  #allocation0 [shape = 'u32[]', space=smem, size = 0x4, offset = 0x4, fixed_abs, tag = 'smem constant byte address 0x4 - core index']
  #allocation1 [shape = 'u32[144,128]{1,0:T(1,128)}', space=vmem, size = 0x12000, scoped, tag = 'internal scratch']
  #allocation2 [shape = 'f32[128,128]{1,0:T(8,128)}', space=vmem, size = 0x10000, scoped, tag = 'scratch operand']
  %s0 = inlined_call_operand.hbm [shape: bf16[128,256], index: 0, kind: input, shape index: {}]
  %s1 = inlined_call_operand.hbm [shape: bf16[256,128], index: 1, kind: input, shape index: {}]
  %s2 = inlined_call_operand.hbm [shape: f32[128,128], index: 2, kind: output, shape index: {}]
  %s3 = sld [smem:[#allocation0]]
  $region34: #{tpu_custom_call.1} parent=0
    _
  %s5 = ssub.s32 1, %s3
  %s6 = scalar_select 0, %s5, %s3
  $region1: #{tpu_custom_call.1} parent=0
    #allocation3 [shape = 'u8[65536]{0}', space=vmem, size = 0x10000, scoped, tag = 'input window, operand 0, single buffered']
    #allocation4 [shape = 's32[1]{0}', space=sflag, size = 0x4, scoped, tag = 'scoped memory for tpu_custom_call.1']
    #allocation5 [shape = 's32[1]{0}', space=sflag, size = 0x4, scoped, tag = 'scoped memory for tpu_custom_call.1']
    #allocation6 [shape = 'u8[65536]{0}', space=vmem, size = 0x10000, scoped, tag = 'input window, operand 1, single buffered']
    #allocation7 [shape = 's32[1]{0}', space=sflag, size = 0x4, scoped, tag = 'scoped memory for tpu_custom_call.1']
    #allocation8 [shape = 'u8[65536]{0}', space=vmem, size = 0x10000, scoped, tag = 'output window, operand 0, single buffered']
    %7 = vsyncpa [#allocation4], 0
    %8 = vsyncpa [#allocation7], 0
    %9 = vsyncpa [#allocation5], 0
    // Predicated region
    $region2: #{tpu_custom_call.1} parent=1 // pred_check
      _
    $region3: #{tpu_custom_call.1} parent=1 // pred_check_branch
      %11 = sbr.rel (0) target = $region5
    $region4: #{tpu_custom_call.1} parent=1 // pred_region
      %s13 = ssub.s32 2048, 2048
      %14 = vsyncadd [#allocation4], %s13
      %s15 = sshll.u32 [#allocation3], 4
      %s16 = int_to_ptr.vmem [resolvable:$true] %s15
      %21 = dma.hbm_to_vmem [thread:$0]  %s0, 2048, %s16, [#allocation4], 128, 128, 8
    $region5: #{tpu_custom_call.1} parent=1 // pred_fallthru
      _
    // Predicated region
    $region6: #{tpu_custom_call.1} parent=1 // pred_check
      _
    $region7: #{tpu_custom_call.1} parent=1 // pred_check_branch
      %23 = sbr.rel (0) target = $region9
    $region8: #{tpu_custom_call.1} parent=1 // pred_region
      %s25 = ssub.s32 2048, 2048
      %26 = vsyncadd [#allocation7], %s25
      %s27 = sshll.u32 [#allocation6], 4
      %s28 = int_to_ptr.vmem [resolvable:$true] %s27
      %33 = dma.hbm_to_vmem [thread:$0]  %s1, 2048, %s28, [#allocation7], 64, 64, 4
    $region9: #{tpu_custom_call.1} parent=1 // pred_fallthru
      _
    // Predicated region
    $region10: #{tpu_custom_call.1} parent=1 // pred_check
      _
    $region11: #{tpu_custom_call.1} parent=1 // pred_check_branch
      %35 = sbr.rel (0) target = $region13
    $region12: #{tpu_custom_call.1} parent=1 // pred_region
      %36 = dma.done [#allocation4], 2048
    $region13: #{tpu_custom_call.1} parent=1 // pred_fallthru
      _
    // Predicated region
    $region14: #{tpu_custom_call.1} parent=1 // pred_check
      _
    $region15: #{tpu_custom_call.1} parent=1 // pred_check_branch
      %38 = sbr.rel (0) target = $region17
    $region16: #{tpu_custom_call.1} parent=1 // pred_region
      %39 = dma.done [#allocation7], 2048
    $region17: #{tpu_custom_call.1} parent=1 // pred_fallthru
      _
    %p41 = scmp.eq.s32.totalorder 0, 0
    // Predicated region
    $region18: #{tpu_custom_call.1} parent=1 // pred_check
      %p42 = pneg %p41
    $region19: #{tpu_custom_call.1} parent=1 // pred_check_branch
      %44 = sbr.rel (%p42) target = $region21
    $region20: #{tpu_custom_call.1} parent=1 // pred_region
      %45 = vst [vmem:[#allocation2] sm:$0xff] 0.0
      %46 = vst [vmem:[#allocation2 + $0x8] sm:$0xff] 0.0
      %47 = vst [vmem:[#allocation2 + $0x10] sm:$0xff] 0.0
      %48 = vst [vmem:[#allocation2 + $0x18] sm:$0xff] 0.0
      %49 = vst [vmem:[#allocation2 + $0x20] sm:$0xff] 0.0
      %50 = vst [vmem:[#allocation2 + $0x28] sm:$0xff] 0.0
      %51 = vst [vmem:[#allocation2 + $0x30] sm:$0xff] 0.0
      %52 = vst [vmem:[#allocation2 + $0x38] sm:$0xff] 0.0
      %53 = vst [vmem:[#allocation2 + $0x40] sm:$0xff] 0.0
      %54 = vst [vmem:[#allocation2 + $0x48] sm:$0xff] 0.0
      %55 = vst [vmem:[#allocation2 + $0x50] sm:$0xff] 0.0
      %56 = vst [vmem:[#allocation2 + $0x58] sm:$0xff] 0.0
      %57 = vst [vmem:[#allocation2 + $0x60] sm:$0xff] 0.0
      %58 = vst [vmem:[#allocation2 + $0x68] sm:$0xff] 0.0
      %59 = vst [vmem:[#allocation2 + $0x70] sm:$0xff] 0.0
      %60 = vst [vmem:[#allocation2 + $0x78] sm:$0xff] 0.0
    $region21: #{tpu_custom_call.1} parent=1 // pred_fallthru
      _
    %v61 = vld [vmem:[#allocation2] sm:$0xff]
    %v62 = vld [vmem:[#allocation2 + $0x8] sm:$0xff]
    %v63 = vld [vmem:[#allocation2 + $0x10] sm:$0xff]
    %v64 = vld [vmem:[#allocation2 + $0x18] sm:$0xff]
    %v65 = vld [vmem:[#allocation2 + $0x20] sm:$0xff]
    %v66 = vld [vmem:[#allocation2 + $0x28] sm:$0xff]
    %v67 = vld [vmem:[#allocation2 + $0x30] sm:$0xff]
    %v68 = vld [vmem:[#allocation2 + $0x38] sm:$0xff]
    %v69 = vld [vmem:[#allocation2 + $0x40] sm:$0xff]
    %v70 = vld [vmem:[#allocation2 + $0x48] sm:$0xff]
    %v71 = vld [vmem:[#allocation2 + $0x50] sm:$0xff]
    %v72 = vld [vmem:[#allocation2 + $0x58] sm:$0xff]
    %v73 = vld [vmem:[#allocation2 + $0x60] sm:$0xff]
    %v74 = vld [vmem:[#allocation2 + $0x68] sm:$0xff]
    %v75 = vld [vmem:[#allocation2 + $0x70] sm:$0xff]
    %v76 = vld [vmem:[#allocation2 + $0x78] sm:$0xff]
    %v77 = vld [vmem:[#allocation3] sm:$0xff]
    %v78 = vld [vmem:[#allocation3 + $0x8] sm:$0xff]
    %v79 = vld [vmem:[#allocation3 + $0x10] sm:$0xff]
    %v80 = vld [vmem:[#allocation3 + $0x18] sm:$0xff]
    %v81 = vld [vmem:[#allocation3 + $0x20] sm:$0xff]
    %v82 = vld [vmem:[#allocation3 + $0x28] sm:$0xff]
    %v83 = vld [vmem:[#allocation3 + $0x30] sm:$0xff]
    %v84 = vld [vmem:[#allocation3 + $0x38] sm:$0xff]
    %v85 = vld [vmem:[#allocation3 + $0x40] sm:$0xff]
    %v86 = vld [vmem:[#allocation3 + $0x48] sm:$0xff]
    %v87 = vld [vmem:[#allocation3 + $0x50] sm:$0xff]
    %v88 = vld [vmem:[#allocation3 + $0x58] sm:$0xff]
    %v89 = vld [vmem:[#allocation3 + $0x60] sm:$0xff]
    %v90 = vld [vmem:[#allocation3 + $0x68] sm:$0xff]
    %v91 = vld [vmem:[#allocation3 + $0x70] sm:$0xff]
    %v92 = vld [vmem:[#allocation3 + $0x78] sm:$0xff]
    %v93 = vld [vmem:[#allocation6] sm:$0xf]
    %v94 = vld [vmem:[#allocation6 + $0x4] sm:$0xf]
    %v95 = vld [vmem:[#allocation6 + $0x8] sm:$0xf]
    %v96 = vld [vmem:[#allocation6 + $0xc] sm:$0xf]
    %v97 = vld [vmem:[#allocation6 + $0x10] sm:$0xf]
    %v98 = vld [vmem:[#allocation6 + $0x14] sm:$0xf]
    %v99 = vld [vmem:[#allocation6 + $0x18] sm:$0xf]
    %v100 = vld [vmem:[#allocation6 + $0x1c] sm:$0xf]
    %v101 = vld [vmem:[#allocation6 + $0x20] sm:$0xf]
    %v102 = vld [vmem:[#allocation6 + $0x24] sm:$0xf]
    %v103 = vld [vmem:[#allocation6 + $0x28] sm:$0xf]
    %v104 = vld [vmem:[#allocation6 + $0x2c] sm:$0xf]
    %v105 = vld [vmem:[#allocation6 + $0x30] sm:$0xf]
    %v106 = vld [vmem:[#allocation6 + $0x34] sm:$0xf]
    %v107 = vld [vmem:[#allocation6 + $0x38] sm:$0xf]
    %v108 = vld [vmem:[#allocation6 + $0x3c] sm:$0xf]
    %v109 = vld [vmem:[#allocation6 + $0x40] sm:$0xf]
    %v110 = vld [vmem:[#allocation6 + $0x44] sm:$0xf]
    %v111 = vld [vmem:[#allocation6 + $0x48] sm:$0xf]
    %v112 = vld [vmem:[#allocation6 + $0x4c] sm:$0xf]
    %v113 = vld [vmem:[#allocation6 + $0x50] sm:$0xf]
    %v114 = vld [vmem:[#allocation6 + $0x54] sm:$0xf]
    %v115 = vld [vmem:[#allocation6 + $0x58] sm:$0xf]
    %v116 = vld [vmem:[#allocation6 + $0x5c] sm:$0xf]
    %v117 = vld [vmem:[#allocation6 + $0x60] sm:$0xf]
    %v118 = vld [vmem:[#allocation6 + $0x64] sm:$0xf]
    %v119 = vld [vmem:[#allocation6 + $0x68] sm:$0xf]
    %v120 = vld [vmem:[#allocation6 + $0x6c] sm:$0xf]
    %v121 = vld [vmem:[#allocation6 + $0x70] sm:$0xf]
    %v122 = vld [vmem:[#allocation6 + $0x74] sm:$0xf]
    %v123 = vld [vmem:[#allocation6 + $0x78] sm:$0xf]
    %v124 = vld [vmem:[#allocation6 + $0x7c] sm:$0xf]
    %v141 = vunpack.c.l.b16 %v77
    %v142 = vunpack.c.h.b16 %v77
    %v143 = vunpack.c.l.b16 %v78
    %v144 = vunpack.c.h.b16 %v78
    %v145 = vunpack.c.l.b16 %v79
    %v146 = vunpack.c.h.b16 %v79
    %v147 = vunpack.c.l.b16 %v80
    %v148 = vunpack.c.h.b16 %v80
    %v149 = vunpack.c.l.b16 %v81
    %v150 = vunpack.c.h.b16 %v81
    %v151 = vunpack.c.l.b16 %v82
    %v152 = vunpack.c.h.b16 %v82
    %v153 = vunpack.c.l.b16 %v83
    %v154 = vunpack.c.h.b16 %v83
    %v155 = vunpack.c.l.b16 %v84
    %v156 = vunpack.c.h.b16 %v84
    %v157 = vunpack.c.l.b16 %v85
    %v158 = vunpack.c.h.b16 %v85
    %v159 = vunpack.c.l.b16 %v86
    %v160 = vunpack.c.h.b16 %v86
    %v161 = vunpack.c.l.b16 %v87
    %v162 = vunpack.c.h.b16 %v87
    %v163 = vunpack.c.l.b16 %v88
    %v164 = vunpack.c.h.b16 %v88
    %v165 = vunpack.c.l.b16 %v89
    %v166 = vunpack.c.h.b16 %v89
    %v167 = vunpack.c.l.b16 %v90
    %v168 = vunpack.c.h.b16 %v90
    %v169 = vunpack.c.l.b16 %v91
    %v170 = vunpack.c.h.b16 %v91
    %v171 = vunpack.c.l.b16 %v92
    %v172 = vunpack.c.h.b16 %v92
    %v173 = vpack.c.b16 %v143, %v141
    %v174 = vpack.c.b16 %v144, %v142
    %v175 = vpack.c.b16 %v147, %v145
    %v176 = vpack.c.b16 %v148, %v146
    %v177 = vpack.c.b16 %v151, %v149
    %v178 = vpack.c.b16 %v152, %v150
    %v179 = vpack.c.b16 %v155, %v153
    %v180 = vpack.c.b16 %v156, %v154
    %v181 = vpack.c.b16 %v159, %v157
    %v182 = vpack.c.b16 %v160, %v158
    %v183 = vpack.c.b16 %v163, %v161
    %v184 = vpack.c.b16 %v164, %v162
    %v185 = vpack.c.b16 %v167, %v165
    %v186 = vpack.c.b16 %v168, %v166
    %v187 = vpack.c.b16 %v171, %v169
    %v188 = vpack.c.b16 %v172, %v170
    %v237 = vunpack.c.l.b16 %v93
    %v238 = vunpack.c.l.b16 %v94
    %v239 = vunpack.c.l.b16 %v95
    %v240 = vunpack.c.l.b16 %v96
    %v241 = vunpack.c.l.b16 %v97
    %v242 = vunpack.c.l.b16 %v98
    %v243 = vunpack.c.l.b16 %v99
    %v244 = vunpack.c.l.b16 %v100
    %v245 = vunpack.c.l.b16 %v101
    %v246 = vunpack.c.l.b16 %v102
    %v247 = vunpack.c.l.b16 %v103
    %v248 = vunpack.c.l.b16 %v104
    %v249 = vunpack.c.l.b16 %v105
    %v250 = vunpack.c.l.b16 %v106
    %v251 = vunpack.c.l.b16 %v107
    %v252 = vunpack.c.l.b16 %v108
    %v253 = vunpack.c.l.b16 %v109
    %v254 = vunpack.c.l.b16 %v110
    %v255 = vunpack.c.l.b16 %v111
    %v256 = vunpack.c.l.b16 %v112
    %v257 = vunpack.c.l.b16 %v113
    %v258 = vunpack.c.l.b16 %v114
    %v259 = vunpack.c.l.b16 %v115
    %v260 = vunpack.c.l.b16 %v116
    %v261 = vunpack.c.l.b16 %v117
    %v262 = vunpack.c.l.b16 %v118
    %v263 = vunpack.c.l.b16 %v119
    %v264 = vunpack.c.l.b16 %v120
    %v265 = vunpack.c.l.b16 %v121
    %v266 = vunpack.c.l.b16 %v122
    %v267 = vunpack.c.l.b16 %v123
    %v268 = vunpack.c.l.b16 %v124
    %v269 = vpack.c.b16 %v238, %v237
    %v270 = vpack.c.b16 %v240, %v239
    %v271 = vpack.c.b16 %v242, %v241
    %v272 = vpack.c.b16 %v244, %v243
    %v273 = vpack.c.b16 %v246, %v245
    %v274 = vpack.c.b16 %v248, %v247
    %v275 = vpack.c.b16 %v250, %v249
    %v276 = vpack.c.b16 %v252, %v251
    %v277 = vpack.c.b16 %v254, %v253
    %v278 = vpack.c.b16 %v256, %v255
    %v279 = vpack.c.b16 %v258, %v257
    %v280 = vpack.c.b16 %v260, %v259
    %v281 = vpack.c.b16 %v262, %v261
    %v282 = vpack.c.b16 %v264, %v263
    %v283 = vpack.c.b16 %v266, %v265
    %v284 = vpack.c.b16 %v268, %v267
    %301 = vmatprep.subr.bf16.mxu0 0
    %302 = vmatpush1.bf16.msra.mxu0 %v269
    %303 = vmatprep.subr.bf16.mxu0 0
    %304 = vmatpush1.bf16.msra.mxu0 %v270
    %305 = vmatprep.subr.bf16.mxu0 0
    %306 = vmatpush1.bf16.msra.mxu0 %v271
    %307 = vmatprep.subr.bf16.mxu0 0
    %308 = vmatpush1.bf16.msra.mxu0 %v272
    %309 = vmatprep.subr.bf16.mxu0 0
    %310 = vmatpush1.bf16.msra.mxu0 %v273
    %311 = vmatprep.subr.bf16.mxu0 0
    %312 = vmatpush1.bf16.msra.mxu0 %v274
    %313 = vmatprep.subr.bf16.mxu0 0
    %314 = vmatpush1.bf16.msra.mxu0 %v275
    %315 = vmatprep.subr.bf16.mxu0 0
    %316 = vmatpush1.bf16.msra.mxu0 %v276
    %317 = vmatprep.subr.bf16.mxu0 0
    %318 = vmatpush1.bf16.msra.mxu0 %v277
    %319 = vmatprep.subr.bf16.mxu0 0
    %320 = vmatpush1.bf16.msra.mxu0 %v278
    %321 = vmatprep.subr.bf16.mxu0 0
    %322 = vmatpush1.bf16.msra.mxu0 %v279
    %323 = vmatprep.subr.bf16.mxu0 0
    %324 = vmatpush1.bf16.msra.mxu0 %v280
    %325 = vmatprep.subr.bf16.mxu0 0
    %326 = vmatpush1.bf16.msra.mxu0 %v281
    %327 = vmatprep.subr.bf16.mxu0 0
    %328 = vmatpush1.bf16.msra.mxu0 %v282
    %329 = vmatprep.subr.bf16.mxu0 0
    %330 = vmatpush1.bf16.msra.mxu0 %v283
    %331 = vmatprep.subr.bf16.mxu0 0
    %332 = vmatpush1.bf16.msra.mxu0 %v284
    %333 = vmatprep.mubr.bf16.mxu0 %v174
    %334 = vmatmul.mubr.bf16.gmra.mrb[0].mxu0 %v173
    %v335 = vpop.f32.mrb[0].mxu0
    %v336 = vadd.f32 0.0, %v335
    %v337 = vpop.f32.mrb[0].mxu0
    %v338 = vpop.f32.mrb[0].mxu0
    %v339 = vadd.f32 0.0, %v338
    %v340 = vpop.f32.mrb[0].mxu0
    %341 = vmatprep.mubr.bf16.mxu0 %v176
    %342 = vmatmul.mubr.bf16.gmra.mrb[0].mxu0 %v175
    %v343 = vpop.f32.mrb[0].mxu0
    %v344 = vadd.f32 0.0, %v343
    %v345 = vpop.f32.mrb[0].mxu0
    %v346 = vpop.f32.mrb[0].mxu0
    %v347 = vadd.f32 0.0, %v346
    %v348 = vpop.f32.mrb[0].mxu0
    %349 = vmatprep.mubr.bf16.mxu0 %v178
    %350 = vmatmul.mubr.bf16.gmra.mrb[0].mxu0 %v177
    %v351 = vpop.f32.mrb[0].mxu0
    %v352 = vadd.f32 0.0, %v351
    %v353 = vpop.f32.mrb[0].mxu0
    %v354 = vpop.f32.mrb[0].mxu0
    %v355 = vadd.f32 0.0, %v354
    %v356 = vpop.f32.mrb[0].mxu0
    %357 = vmatprep.mubr.bf16.mxu0 %v180
    %358 = vmatmul.mubr.bf16.gmra.mrb[0].mxu0 %v179
    %v359 = vpop.f32.mrb[0].mxu0
    %v360 = vadd.f32 0.0, %v359
    %v361 = vpop.f32.mrb[0].mxu0
    %v362 = vpop.f32.mrb[0].mxu0
    %v363 = vadd.f32 0.0, %v362
    %v364 = vpop.f32.mrb[0].mxu0
    %365 = vmatprep.mubr.bf16.mxu0 %v182
    %366 = vmatmul.mubr.bf16.gmra.mrb[0].mxu0 %v181
    %v367 = vpop.f32.mrb[0].mxu0
    %v368 = vadd.f32 0.0, %v367
    %v369 = vpop.f32.mrb[0].mxu0
    %v370 = vpop.f32.mrb[0].mxu0
    %v371 = vadd.f32 0.0, %v370
    %v372 = vpop.f32.mrb[0].mxu0
    %373 = vmatprep.mubr.bf16.mxu0 %v184
    %374 = vmatmul.mubr.bf16.gmra.mrb[0].mxu0 %v183
    %v375 = vpop.f32.mrb[0].mxu0
    %v376 = vadd.f32 0.0, %v375
    %v377 = vpop.f32.mrb[0].mxu0
    %v378 = vpop.f32.mrb[0].mxu0
    %v379 = vadd.f32 0.0, %v378
    %v380 = vpop.f32.mrb[0].mxu0
    %381 = vmatprep.mubr.bf16.mxu0 %v186
    %382 = vmatmul.mubr.bf16.gmra.mrb[0].mxu0 %v185
    %v383 = vpop.f32.mrb[0].mxu0
    %v384 = vadd.f32 0.0, %v383
    %v385 = vpop.f32.mrb[0].mxu0
    %v386 = vpop.f32.mrb[0].mxu0
    %v387 = vadd.f32 0.0, %v386
    %v388 = vpop.f32.mrb[0].mxu0
    %389 = vmatprep.mubr.bf16.mxu0 %v188
    %390 = vmatmul.mubr.bf16.gmra.mrb[0].mxu0 %v187
    %v391 = vpop.f32.mrb[0].mxu0
    %v392 = vadd.f32 0.0, %v391
    %v393 = vpop.f32.mrb[0].mxu0
    %v394 = vpop.f32.mrb[0].mxu0
    %v395 = vadd.f32 0.0, %v394
    %v396 = vpop.f32.mrb[0].mxu0
    %397 = vdwg.mxu0
    %v398 = vadd.f32 %v61, %v336
    %v399 = vadd.f32 %v62, %v339
    %v400 = vadd.f32 %v63, %v344
    %v401 = vadd.f32 %v64, %v347
    %v402 = vadd.f32 %v65, %v352
    %v403 = vadd.f32 %v66, %v355
    %v404 = vadd.f32 %v67, %v360
    %v405 = vadd.f32 %v68, %v363
    %v406 = vadd.f32 %v69, %v368
    %v407 = vadd.f32 %v70, %v371
    %v408 = vadd.f32 %v71, %v376
    %v409 = vadd.f32 %v72, %v379
    %v410 = vadd.f32 %v73, %v384
    %v411 = vadd.f32 %v74, %v387
    %v412 = vadd.f32 %v75, %v392
    %v413 = vadd.f32 %v76, %v395
    %414 = vst [vmem:[#allocation2] sm:$0xff] %v398
    %415 = vst [vmem:[#allocation2 + $0x8] sm:$0xff] %v399
    %416 = vst [vmem:[#allocation2 + $0x10] sm:$0xff] %v400
    %417 = vst [vmem:[#allocation2 + $0x18] sm:$0xff] %v401
    %418 = vst [vmem:[#allocation2 + $0x20] sm:$0xff] %v402
    %419 = vst [vmem:[#allocation2 + $0x28] sm:$0xff] %v403
    %420 = vst [vmem:[#allocation2 + $0x30] sm:$0xff] %v404
    %421 = vst [vmem:[#allocation2 + $0x38] sm:$0xff] %v405
    %422 = vst [vmem:[#allocation2 + $0x40] sm:$0xff] %v406
    %423 = vst [vmem:[#allocation2 + $0x48] sm:$0xff] %v407
    %424 = vst [vmem:[#allocation2 + $0x50] sm:$0xff] %v408
    %425 = vst [vmem:[#allocation2 + $0x58] sm:$0xff] %v409
    %426 = vst [vmem:[#allocation2 + $0x60] sm:$0xff] %v410
    %427 = vst [vmem:[#allocation2 + $0x68] sm:$0xff] %v411
    %428 = vst [vmem:[#allocation2 + $0x70] sm:$0xff] %v412
    %429 = vst [vmem:[#allocation2 + $0x78] sm:$0xff] %v413
    // Predicated region
    $region22: #{tpu_custom_call.1} parent=1 // pred_check
      %p430 = pneg %p41
    $region23: #{tpu_custom_call.1} parent=1 // pred_check_branch
      %432 = sbr.rel (%p430) target = $region25
    $region24: #{tpu_custom_call.1} parent=1 // pred_region
      %v433 = vld [vmem:[#allocation2] sm:$0xff]
      %v434 = vld [vmem:[#allocation2 + $0x8] sm:$0xff]
      %v435 = vld [vmem:[#allocation2 + $0x10] sm:$0xff]
      %v436 = vld [vmem:[#allocation2 + $0x18] sm:$0xff]
      %v437 = vld [vmem:[#allocation2 + $0x20] sm:$0xff]
      %v438 = vld [vmem:[#allocation2 + $0x28] sm:$0xff]
      %v439 = vld [vmem:[#allocation2 + $0x30] sm:$0xff]
      %v440 = vld [vmem:[#allocation2 + $0x38] sm:$0xff]
      %v441 = vld [vmem:[#allocation2 + $0x40] sm:$0xff]
      %v442 = vld [vmem:[#allocation2 + $0x48] sm:$0xff]
      %v443 = vld [vmem:[#allocation2 + $0x50] sm:$0xff]
      %v444 = vld [vmem:[#allocation2 + $0x58] sm:$0xff]
      %v445 = vld [vmem:[#allocation2 + $0x60] sm:$0xff]
      %v446 = vld [vmem:[#allocation2 + $0x68] sm:$0xff]
      %v447 = vld [vmem:[#allocation2 + $0x70] sm:$0xff]
      %v448 = vld [vmem:[#allocation2 + $0x78] sm:$0xff]
      %449 = vst [vmem:[#allocation8] sm:$0xff] %v433
      %450 = vst [vmem:[#allocation8 + $0x8] sm:$0xff] %v434
      %451 = vst [vmem:[#allocation8 + $0x10] sm:$0xff] %v435
      %452 = vst [vmem:[#allocation8 + $0x18] sm:$0xff] %v436
      %453 = vst [vmem:[#allocation8 + $0x20] sm:$0xff] %v437
      %454 = vst [vmem:[#allocation8 + $0x28] sm:$0xff] %v438
      %455 = vst [vmem:[#allocation8 + $0x30] sm:$0xff] %v439
      %456 = vst [vmem:[#allocation8 + $0x38] sm:$0xff] %v440
      %457 = vst [vmem:[#allocation8 + $0x40] sm:$0xff] %v441
      %458 = vst [vmem:[#allocation8 + $0x48] sm:$0xff] %v442
      %459 = vst [vmem:[#allocation8 + $0x50] sm:$0xff] %v443
      %460 = vst [vmem:[#allocation8 + $0x58] sm:$0xff] %v444
      %461 = vst [vmem:[#allocation8 + $0x60] sm:$0xff] %v445
      %462 = vst [vmem:[#allocation8 + $0x68] sm:$0xff] %v446
      %463 = vst [vmem:[#allocation8 + $0x70] sm:$0xff] %v447
      %464 = vst [vmem:[#allocation8 + $0x78] sm:$0xff] %v448
    $region25: #{tpu_custom_call.1} parent=1 // pred_fallthru
      _
    // Predicated region
    $region26: #{tpu_custom_call.1} parent=1 // pred_check
      _
    $region27: #{tpu_custom_call.1} parent=1 // pred_check_branch
      %466 = sbr.rel (0) target = $region29
    $region28: #{tpu_custom_call.1} parent=1 // pred_region
      %s468 = ssub.s32 2048, 2048
      %469 = vsyncadd [#allocation5], %s468
      %s470 = sshll.u32 [#allocation8], 4
      %s471 = int_to_ptr.vmem [resolvable:$true] %s470
      %476 = dma.vmem_to_hbm [thread:$0]  %s471, 2048, %s2, [#allocation5], 128, 128, 8
    $region29: #{tpu_custom_call.1} parent=1 // pred_fallthru
      _
    // Predicated region
    $region30: #{tpu_custom_call.1} parent=1 // pred_check
      _
    $region31: #{tpu_custom_call.1} parent=1 // pred_check_branch
      %478 = sbr.rel (0) target = $region33
    $region32: #{tpu_custom_call.1} parent=1 // pred_region
      %479 = dma.done [#allocation5], 2048
    $region33: #{tpu_custom_call.1} parent=1 // pred_fallthru
      _
    %480 = vsyncpa [#allocation4], 1
    %481 = vsyncpa [#allocation7], 1
    %482 = vsyncpa [#allocation5], 1

</llo_original>
